<compile_context>
chip_gen: v7x
topology: tpu7x:2x2x1
jax: 0.10.0
libtpu: 0.0.40
codegen_flags: <defaults>
</compile_context>

<pallas_src>
import functools

import jax
import jax.numpy as jnp
from jax.experimental import pallas as pl
from jax.experimental.pallas import tpu as pltpu


def _round_up(n, m):
    return ((n + m - 1) // m) * m


def _finetune_kernel(x_ref, w0_ref, b0_ref, wl_ref, bl_ref, wlc_ref, blc_ref,
                     feat_ref, logp_ref):
    """One batch tile: fc0+ReLU, then two independent matmuls (feat, fused logits)."""
    # fc0 + ReLU (interior ReLUs of the module are idempotent -> single ReLU).
    h = jnp.dot(x_ref[...], w0_ref[...], preferred_element_type=jnp.float32)
    h = jnp.maximum(h + b0_ref[...], 0.0)
    h_lo = h.astype(w0_ref.dtype)  # back to the MXU compute dtype (bf16)

    # feature output (last fc of self.fcs), padded to 128 lanes.
    feat = jnp.dot(h_lo, wl_ref[...], preferred_element_type=jnp.float32)
    feat_ref[...] = (feat + bl_ref[...]).astype(feat_ref.dtype)

    # fused classifier: logits = h @ (Wl @ Wc) + (bl @ Wc + bc); padded class
    # columns carry a -1e30 bias so they never win the max / contribute to exp.
    logits = jnp.dot(h_lo, wlc_ref[...], preferred_element_type=jnp.float32)
    logits = logits + blc_ref[...]
    m = jnp.max(logits, axis=-1, keepdims=True)
    shifted = logits - m
    lse = jnp.log(jnp.sum(jnp.exp(shifted), axis=-1, keepdims=True))
    logp_ref[...] = (shifted - lse).astype(logp_ref.dtype)


@functools.partial(jax.jit, static_argnames=("block_b", "compute_dtype"))
def finetune_forward(x, w0, b0, wl, bl, wc, bc, *,
                     block_b=1024, compute_dtype=jnp.bfloat16):
    """Pallas-backed FinNeTune.forward: returns (feat, log_softmax(logits))."""
    B, in_features = x.shape
    model_width = w0.shape[1]
    out_features = wl.shape[1]
    n_classes = wc.shape[1]
    out_dtype = x.dtype

    # --- wrapper-side fusion & lane-dense padding -------------------------
    f_pad = _round_up(out_features, 128)
    c_pad = _round_up(n_classes, 128)

    wlc = wl.astype(jnp.float32) @ wc.astype(jnp.float32)                 # (width, classes)
    blc = bl.astype(jnp.float32) @ wc.astype(jnp.float32) + bc.astype(jnp.float32)

    wl_p = jnp.pad(wl.astype(jnp.float32), ((0, 0), (0, f_pad - out_features)))
    bl_p = jnp.pad(bl.astype(jnp.float32), ((0, 0), (0, f_pad - out_features)))
    wlc_p = jnp.pad(wlc, ((0, 0), (0, c_pad - n_classes)))
    blc_p = jnp.pad(blc, ((0, 0), (0, c_pad - n_classes)),
                    constant_values=-1e30)  # mask padded classes out of softmax

    # --- batch tiling ------------------------------------------------------
    tb = min(block_b, _round_up(B, 8))
    tb = _round_up(tb, 8)
    b_pad = _round_up(B, tb)
    if b_pad != B:
        x = jnp.pad(x, ((0, b_pad - B), (0, 0)))

    # bf16 MXU inputs, f32 biases / accumulation / elementwise.
    x_lo = x.astype(compute_dtype)
    w0_lo = w0.astype(compute_dtype)
    wl_lo = wl_p.astype(compute_dtype)
    wlc_lo = wlc_p.astype(compute_dtype)
    b0_f = b0.astype(jnp.float32)

    resident = lambda i: (0, 0)   # weights/biases: same block every grid step
    batched = lambda i: (i, 0)

    itemsize = jnp.dtype(compute_dtype).itemsize
    cost = pl.CostEstimate(
        flops=2 * b_pad * (in_features * model_width
                           + model_width * (f_pad + c_pad)),
        transcendentals=b_pad * c_pad,
        bytes_accessed=(b_pad * in_features * itemsize
                        + (w0_lo.size + wl_lo.size + wlc_lo.size) * itemsize
                        + b_pad * (f_pad + c_pad) * 4),
    )

    feat_p, logp_p = pl.pallas_call(
        _finetune_kernel,
        out_shape=(
            jax.ShapeDtypeStruct((b_pad, f_pad), jnp.float32),
            jax.ShapeDtypeStruct((b_pad, c_pad), jnp.float32),
        ),
        grid=(b_pad // tb,),
        in_specs=[
            pl.BlockSpec((tb, in_features), batched),        # x tile
            pl.BlockSpec((in_features, model_width), resident),
            pl.BlockSpec((1, model_width), resident),
            pl.BlockSpec((model_width, f_pad), resident),
            pl.BlockSpec((1, f_pad), resident),
            pl.BlockSpec((model_width, c_pad), resident),
            pl.BlockSpec((1, c_pad), resident),
        ],
        out_specs=(
            pl.BlockSpec((tb, f_pad), batched),
            pl.BlockSpec((tb, c_pad), batched),
        ),
        compiler_params=pltpu.CompilerParams(
            dimension_semantics=("parallel",),
        ),
        cost_estimate=cost,
    )(x_lo, w0_lo, b0_f, wl_lo, bl_p, wlc_lo, blc_p)

    feat = feat_p[:B, :out_features].astype(out_dtype)
    logp = logp_p[:B, :n_classes].astype(out_dtype)
    return feat, logp


def _init_linear(key, in_features, out_features, dtype=jnp.float32):
    """PyTorch nn.Linear default init: U(-1/sqrt(fan_in), 1/sqrt(fan_in)).

    Returns (W_transposed, bias) with shapes (in, out) and (1, out) for the
    kernel's x @ W + b convention.
    """
    kw, kb = jax.random.split(key)
    bound = 1.0 / jnp.sqrt(jnp.asarray(in_features, dtype))
    w = jax.random.uniform(kw, (out_features, in_features), dtype, -bound, bound)
    b = jax.random.uniform(kb, (out_features,), dtype, -bound, bound)
    return w.T, b.reshape(1, out_features)


def reference_forward(x, w0, b0, wl, bl, wc, bc):
    """Plain-JAX f32 reference matching the PyTorch forward."""
    h = jnp.maximum(x @ w0 + b0, 0.0)
    feat = h @ wl + bl
    logits = feat @ wc + bc
    logp = jax.nn.log_softmax(logits, axis=1)
    return feat, logp


if __name__ == "__main__":
    # Small shapes consistent with the module constructor.
    batch = 8
    input_size = 32
    model_width = 64
    out_features = 64
    n_classes = 29
    # n_layers = 5 -> interior layers are ReLU-only (see note above).

    key = jax.random.PRNGKey(0)
    kx, k0, kl, kc = jax.random.split(key, 4)

    x = jax.random.normal(kx, (batch, input_size), jnp.float32)
    w0, b0 = _init_linear(k0, input_size, model_width)       # fc0
    wl, bl = _init_linear(kl, model_width, out_features)     # fc{n_layers-1}
    wc, bc = _init_linear(kc, out_features, n_classes)       # classifier

    feat, logp = finetune_forward(x, w0, b0, wl, bl, wc, bc)
    jax.block_until_ready((feat, logp))

    # Sanity check against plain-JAX f32 reference (tolerance loosened for the
    # bf16 MXU inputs; accumulation and elementwise work stay in f32).
    feat_ref, logp_ref = reference_forward(x, w0, b0, wl, bl, wc, bc)
    assert feat.shape == feat_ref.shape and logp.shape == logp_ref.shape
    assert jnp.allclose(feat, feat_ref, atol=5e-2, rtol=5e-2), (
        float(jnp.max(jnp.abs(feat - feat_ref))))
    assert jnp.allclose(logp, logp_ref, atol=5e-2, rtol=5e-2), (
        float(jnp.max(jnp.abs(logp - logp_ref))))
    assert bool(jnp.all(jnp.isfinite(logp)))

    print("KERNEL_OK")
</pallas_src>

<mosaic_0001>
module attributes {stable_mosaic.version = 11 : i64} {
  func.func @_finetune_kernel(%arg0: i32, %arg1: memref<8x32xbf16, #tpu.memory_space<vmem>>, %arg2: memref<32x64xbf16, #tpu.memory_space<vmem>>, %arg3: memref<1x64xf32, #tpu.memory_space<vmem>>, %arg4: memref<64x128xbf16, #tpu.memory_space<vmem>>, %arg5: memref<1x128xf32, #tpu.memory_space<vmem>>, %arg6: memref<64x128xbf16, #tpu.memory_space<vmem>>, %arg7: memref<1x128xf32, #tpu.memory_space<vmem>>, %arg8: memref<8x128xf32, #tpu.memory_space<vmem>>, %arg9: memref<8x128xf32, #tpu.memory_space<vmem>>) attributes {dimension_semantics = [#tpu.dimension_semantics<parallel>], iteration_bounds = array<i64: 1>, scalar_prefetch = 0 : i64, scratch_operands = 0 : i64, tpu.core_type = #tpu.core_type<tc>, window_params = [{transform_indices = @transform_0, window_bounds = array<i64: 8, 32>}, {pipeline_mode = #tpu.pipeline_mode<synchronous>, transform_indices = @transform_1, window_bounds = array<i64: 32, 64>}, {pipeline_mode = #tpu.pipeline_mode<synchronous>, transform_indices = @transform_2, window_bounds = array<i64: 1, 64>}, {pipeline_mode = #tpu.pipeline_mode<synchronous>, transform_indices = @transform_3, window_bounds = array<i64: 64, 128>}, {pipeline_mode = #tpu.pipeline_mode<synchronous>, transform_indices = @transform_4, window_bounds = array<i64: 1, 128>}, {pipeline_mode = #tpu.pipeline_mode<synchronous>, transform_indices = @transform_5, window_bounds = array<i64: 64, 128>}, {pipeline_mode = #tpu.pipeline_mode<synchronous>, transform_indices = @transform_6, window_bounds = array<i64: 1, 128>}, {transform_indices = @transform_7, window_bounds = array<i64: 8, 128>}, {transform_indices = @transform_8, window_bounds = array<i64: 8, 128>}]} {
    %c0 = arith.constant 0 : index
    %c0_0 = arith.constant 0 : index
    %0 = vector.load %arg1[%c0, %c0_0] : memref<8x32xbf16, #tpu.memory_space<vmem>>, vector<8x32xbf16>
    %c0_1 = arith.constant 0 : index
    %c0_2 = arith.constant 0 : index
    %1 = vector.load %arg2[%c0_1, %c0_2] : memref<32x64xbf16, #tpu.memory_space<vmem>>, vector<32x64xbf16>
    %cst = arith.constant dense<0.000000e+00> : vector<8x64xf32>
    %2 = tpu.matmul %0, %1, %cst {dimension_numbers = #tpu.dot_dimension_numbers<[1], [0], [0], [1], [0, 0, 1, 1], [], []>} : vector<8x32xbf16>, vector<32x64xbf16>, vector<8x64xf32> -> vector<8x64xf32>
    %c0_3 = arith.constant 0 : index
    %c0_4 = arith.constant 0 : index
    %3 = vector.load %arg3[%c0_3, %c0_4] : memref<1x64xf32, #tpu.memory_space<vmem>>, vector<1x64xf32>
    %4 = vector.broadcast %3 : vector<1x64xf32> to vector<8x64xf32>
    %5 = arith.addf %2, %4 : vector<8x64xf32>
    %cst_5 = arith.constant 0.000000e+00 : f32
    %6 = vector.broadcast %cst_5 : f32 to vector<8x64xf32>
    %7 = arith.maximumf %5, %6 : vector<8x64xf32>
    %8 = arith.truncf %7 : vector<8x64xf32> to vector<8x64xbf16>
    %c0_6 = arith.constant 0 : index
    %c0_7 = arith.constant 0 : index
    %9 = vector.load %arg4[%c0_6, %c0_7] : memref<64x128xbf16, #tpu.memory_space<vmem>>, vector<64x128xbf16>
    %cst_8 = arith.constant dense<0.000000e+00> : vector<8x128xf32>
    %10 = tpu.matmul %8, %9, %cst_8 {dimension_numbers = #tpu.dot_dimension_numbers<[1], [0], [0], [1], [0, 0, 1, 1], [], []>} : vector<8x64xbf16>, vector<64x128xbf16>, vector<8x128xf32> -> vector<8x128xf32>
    %c0_9 = arith.constant 0 : index
    %c0_10 = arith.constant 0 : index
    %11 = vector.load %arg5[%c0_9, %c0_10] : memref<1x128xf32, #tpu.memory_space<vmem>>, vector<1x128xf32>
    %12 = vector.broadcast %11 : vector<1x128xf32> to vector<8x128xf32>
    %13 = arith.addf %10, %12 : vector<8x128xf32>
    %c0_11 = arith.constant 0 : index
    %c0_12 = arith.constant 0 : index
    %14 = vector.load %arg8[%c0_11, %c0_12] : memref<8x128xf32, #tpu.memory_space<vmem>>, vector<8x128xf32>
    tpu.vector_store %arg8[%c0_11, %c0_12], %13 {strides = array<i32>} : memref<8x128xf32, #tpu.memory_space<vmem>>, vector<8x128xf32>,
    %c0_13 = arith.constant 0 : index
    %c0_14 = arith.constant 0 : index
    %15 = vector.load %arg6[%c0_13, %c0_14] : memref<64x128xbf16, #tpu.memory_space<vmem>>, vector<64x128xbf16>
    %cst_15 = arith.constant dense<0.000000e+00> : vector<8x128xf32>
    %16 = tpu.matmul %8, %15, %cst_15 {dimension_numbers = #tpu.dot_dimension_numbers<[1], [0], [0], [1], [0, 0, 1, 1], [], []>} : vector<8x64xbf16>, vector<64x128xbf16>, vector<8x128xf32> -> vector<8x128xf32>
    %c0_16 = arith.constant 0 : index
    %c0_17 = arith.constant 0 : index
    %17 = vector.load %arg7[%c0_16, %c0_17] : memref<1x128xf32, #tpu.memory_space<vmem>>, vector<1x128xf32>
    %18 = vector.broadcast %17 : vector<1x128xf32> to vector<8x128xf32>
    %19 = arith.addf %16, %18 : vector<8x128xf32>
    %cst_18 = arith.constant dense<0xFF800000> : vector<8xf32>
    %20 = vector.multi_reduction <maximumf>, %19, %cst_18 [1] : vector<8x128xf32> to vector<8xf32>
    %21 = vector.shape_cast %20 : vector<8xf32> to vector<8x1xf32>
    %22 = vector.broadcast %21 : vector<8x1xf32> to vector<8x128xf32>
    %23 = arith.subf %19, %22 : vector<8x128xf32>
    %24 = math.exp %23 : vector<8x128xf32>
    %cst_19 = arith.constant dense<0.000000e+00> : vector<8xf32>
    %25 = vector.multi_reduction <add>, %24, %cst_19 [1] : vector<8x128xf32> to vector<8xf32>
    %26 = vector.shape_cast %25 : vector<8xf32> to vector<8x1xf32>
    %27 = math.log %26 : vector<8x1xf32>
    %28 = vector.broadcast %27 : vector<8x1xf32> to vector<8x128xf32>
    %29 = arith.subf %23, %28 : vector<8x128xf32>
    %c0_20 = arith.constant 0 : index
    %c0_21 = arith.constant 0 : index
    %30 = vector.load %arg9[%c0_20, %c0_21] : memref<8x128xf32, #tpu.memory_space<vmem>>, vector<8x128xf32>
    tpu.vector_store %arg9[%c0_20, %c0_21], %29 {strides = array<i32>} : memref<8x128xf32, #tpu.memory_space<vmem>>, vector<8x128xf32>,
    return
  }
  func.func @transform_0(%arg0: i32) -> (i32, i32) {
    %c0_i32 = arith.constant 0 : i32
    %c0_i32_0 = arith.constant 0 : i32
    return %arg0, %c0_i32 : i32, i32
  }
  func.func @transform_1(%arg0: i32) -> (i32, i32) {
    %c0_i32 = arith.constant 0 : i32
    %c0_i32_0 = arith.constant 0 : i32
    %c0_i32_1 = arith.constant 0 : i32
    return %c0_i32, %c0_i32_0 : i32, i32
  }
  func.func @transform_2(%arg0: i32) -> (i32, i32) {
    %c0_i32 = arith.constant 0 : i32
    %c0_i32_0 = arith.constant 0 : i32
    %c0_i32_1 = arith.constant 0 : i32
    return %c0_i32, %c0_i32_0 : i32, i32
  }
  func.func @transform_3(%arg0: i32) -> (i32, i32) {
    %c0_i32 = arith.constant 0 : i32
    %c0_i32_0 = arith.constant 0 : i32
    %c0_i32_1 = arith.constant 0 : i32
    return %c0_i32, %c0_i32_0 : i32, i32
  }
  func.func @transform_4(%arg0: i32) -> (i32, i32) {
    %c0_i32 = arith.constant 0 : i32
    %c0_i32_0 = arith.constant 0 : i32
    %c0_i32_1 = arith.constant 0 : i32
    return %c0_i32, %c0_i32_0 : i32, i32
  }
  func.func @transform_5(%arg0: i32) -> (i32, i32) {
    %c0_i32 = arith.constant 0 : i32
    %c0_i32_0 = arith.constant 0 : i32
    %c0_i32_1 = arith.constant 0 : i32
    return %c0_i32, %c0_i32_0 : i32, i32
  }
  func.func @transform_6(%arg0: i32) -> (i32, i32) {
    %c0_i32 = arith.constant 0 : i32
    %c0_i32_0 = arith.constant 0 : i32
    %c0_i32_1 = arith.constant 0 : i32
    return %c0_i32, %c0_i32_0 : i32, i32
  }
  func.func @transform_7(%arg0: i32) -> (i32, i32) {
    %c0_i32 = arith.constant 0 : i32
    %c0_i32_0 = arith.constant 0 : i32
    return %arg0, %c0_i32 : i32, i32
  }
  func.func @transform_8(%arg0: i32) -> (i32, i32) {
    %c0_i32 = arith.constant 0 : i32
    %c0_i32_0 = arith.constant 0 : i32
    return %arg0, %c0_i32 : i32, i32
  }
}

</mosaic_0001>

<llo_original>
// kernel: finetune_forward.1
$region0: #{finetune_forward.1}
  #allocation0 [shape = 'u32[]', space=smem, size = 0x4, offset = 0x4, fixed_abs, tag = 'smem constant byte address 0x4 - core index']
  #allocation1 [shape = 'u32[144,128]{1,0:T(1,128)}', space=vmem, size = 0x12000, scoped, tag = 'internal scratch']
  %s0 = inlined_call_operand.vmem [shape: bf16[8,32], index: 0, kind: input, shape index: {}]
  %s1 = inlined_call_operand.vmem [shape: bf16[32,64], index: 1, kind: input, shape index: {}]
  %s2 = inlined_call_operand.vmem [shape: f32[1,64], index: 2, kind: input, shape index: {}]
  %s3 = inlined_call_operand.vmem [shape: bf16[64,128], index: 3, kind: input, shape index: {}]
  %s4 = inlined_call_operand.vmem [shape: f32[1,128], index: 4, kind: input, shape index: {}]
  %s5 = inlined_call_operand.vmem [shape: bf16[64,128], index: 5, kind: input, shape index: {}]
  %s6 = inlined_call_operand.vmem [shape: f32[1,128], index: 6, kind: input, shape index: {}]
  %s7 = inlined_call_operand.hbm [shape: f32[8,128], index: 7, kind: output, shape index: {0}]
  %s8 = inlined_call_operand.hbm [shape: f32[8,128], index: 8, kind: output, shape index: {1}]
  %9 = xla_tuple %s7, %s8
  %s10 = sld [smem:[#allocation0]]
  $region46: #{finetune_forward.1} parent=0
    _
  %s12 = ssub.s32 1, %s10
  %s13 = scalar_select 0, %s12, %s10
  $region1: #{finetune_forward.1} parent=0
    #allocation2 [shape = 'u8[4096]{0}', space=vmem, size = 0x1000, scoped, tag = 'output window, operand 0, single buffered']
    #allocation3 [shape = 's32[1]{0}', space=sflag, size = 0x4, scoped, tag = 'scoped memory for finetune_forward.1']
    #allocation4 [shape = 'u8[4096]{0}', space=vmem, size = 0x1000, scoped, tag = 'output window, operand 1, single buffered']
    #allocation5 [shape = 's32[1]{0}', space=sflag, size = 0x4, scoped, tag = 'scoped memory for finetune_forward.1']
    %14 = vsyncpa [#allocation3], 0
    %15 = vsyncpa [#allocation5], 0
    // Predicated region
    $region2: #{finetune_forward.1} parent=1 // pred_check
      _
    $region3: #{finetune_forward.1} parent=1 // pred_check_branch
      %17 = sbr.rel (0) target = $region5
    $region4: #{finetune_forward.1} parent=1 // pred_region
      _
    $region5: #{finetune_forward.1} parent=1 // pred_fallthru
      _
    // Predicated region
    $region6: #{finetune_forward.1} parent=1 // pred_check
      _
    $region7: #{finetune_forward.1} parent=1 // pred_check_branch
      %19 = sbr.rel (0) target = $region9
    $region8: #{finetune_forward.1} parent=1 // pred_region
      _
    $region9: #{finetune_forward.1} parent=1 // pred_fallthru
      _
    // Predicated region
    $region10: #{finetune_forward.1} parent=1 // pred_check
      _
    $region11: #{finetune_forward.1} parent=1 // pred_check_branch
      %21 = sbr.rel (0) target = $region13
    $region12: #{finetune_forward.1} parent=1 // pred_region
      _
    $region13: #{finetune_forward.1} parent=1 // pred_fallthru
      _
    // Predicated region
    $region14: #{finetune_forward.1} parent=1 // pred_check
      _
    $region15: #{finetune_forward.1} parent=1 // pred_check_branch
      %23 = sbr.rel (0) target = $region17
    $region16: #{finetune_forward.1} parent=1 // pred_region
      _
    $region17: #{finetune_forward.1} parent=1 // pred_fallthru
      _
    // Predicated region
    $region18: #{finetune_forward.1} parent=1 // pred_check
      _
    $region19: #{finetune_forward.1} parent=1 // pred_check_branch
      %25 = sbr.rel (0) target = $region21
    $region20: #{finetune_forward.1} parent=1 // pred_region
      _
    $region21: #{finetune_forward.1} parent=1 // pred_fallthru
      _
    // Predicated region
    $region22: #{finetune_forward.1} parent=1 // pred_check
      _
    $region23: #{finetune_forward.1} parent=1 // pred_check_branch
      %27 = sbr.rel (0) target = $region25
    $region24: #{finetune_forward.1} parent=1 // pred_region
      _
    $region25: #{finetune_forward.1} parent=1 // pred_fallthru
      _
    // Predicated region
    $region26: #{finetune_forward.1} parent=1 // pred_check
      _
    $region27: #{finetune_forward.1} parent=1 // pred_check_branch
      %29 = sbr.rel (0) target = $region29
    $region28: #{finetune_forward.1} parent=1 // pred_region
      _
    $region29: #{finetune_forward.1} parent=1 // pred_fallthru
      _
    %v31 = vld [vmem:[%s0] sm:$0xf]
    %v32 = vld [vmem:[%s1] sm:$0xf]
    %v33 = vld [vmem:[%s1 + $0x4] sm:$0xf]
    %v34 = vld [vmem:[%s1 + $0x8] sm:$0xf]
    %v35 = vld [vmem:[%s1 + $0xc] sm:$0xf]
    %v36 = vld [vmem:[%s2] sm:$0x1]
    %v38 = vlaneseq
    %v39 = vshrl.u32 %v38, 7
    %v40 = vsub.s32 0, %v39
    %v41 = vrot.slane %v36, %v40
    %v47 = vunpack.c.l.b16 %v32
    %v48 = vunpack.c.l.b16 %v33
    %v49 = vunpack.c.l.b16 %v34
    %v50 = vunpack.c.l.b16 %v35
    %v51 = vpack.c.b16 %v48, %v47
    %v52 = vpack.c.b16 %v50, %v49
    %vm55 = vcmask 261120
    %v57 = vsel %vm55, %v31, 0
    %59 = vmatprep.subr.bf16.mxu0 0
    %60 = vmatpush1.bf16.msra.mxu0 %v51
    %61 = vmatprep.subr.bf16.mxu0 0
    %62 = vmatpush1.bf16.msra.mxu0 %v52
    %63 = vmatprep.subr.bf16.mxu0 0
    %64 = vmatpush1.bf16.msra.mxu0 0
    %65 = vmatprep.subr.bf16.mxu0 0
    %66 = vmatpush1.bf16.msra.mxu0 0
    %67 = vmatprep.subr.bf16.mxu0 0
    %68 = vmatpush1.bf16.msra.mxu0 0
    %69 = vmatprep.subr.bf16.mxu0 0
    %70 = vmatpush1.bf16.msra.mxu0 0
    %71 = vmatprep.subr.bf16.mxu0 0
    %72 = vmatpush1.bf16.msra.mxu0 0
    %73 = vmatprep.subr.bf16.mxu0 0
    %74 = vmatpush1.bf16.msra.mxu0 0
    %75 = vmatprep.subr.bf16.mxu0 0
    %76 = vmatpush1.bf16.msra.mxu0 0
    %77 = vmatprep.subr.bf16.mxu0 0
    %78 = vmatpush1.bf16.msra.mxu0 0
    %79 = vmatprep.subr.bf16.mxu0 0
    %80 = vmatpush1.bf16.msra.mxu0 0
    %81 = vmatprep.subr.bf16.mxu0 0
    %82 = vmatpush1.bf16.msra.mxu0 0
    %83 = vmatprep.subr.bf16.mxu0 0
    %84 = vmatpush1.bf16.msra.mxu0 0
    %85 = vmatprep.subr.bf16.mxu0 0
    %86 = vmatpush1.bf16.msra.mxu0 0
    %87 = vmatprep.subr.bf16.mxu0 0
    %88 = vmatpush1.bf16.msra.mxu0 0
    %89 = vmatprep.subr.bf16.mxu0 0
    %90 = vmatpush1.bf16.msra.mxu0 0
    %91 = vmatprep.mubr.bf16.mxu0 0
    %92 = vmatmul.mubr.bf16.gmra.mrb[0].mxu0 %v57
    %v93 = vpop.f32.mrb[0].mxu0
    %v94 = vadd.f32 %v41, %v93
    %v95 = vpop.f32.mrb[0].mxu0
    %v96 = vpop.f32.mrb[0].mxu0
    %v97 = vpop.f32.mrb[0].mxu0
    %98 = vdwg.mxu0
    %v99 = vmax.f32 %v94, 0.0
    %v100 = vpack.c.bf16 %v99, %v99
    %v101 = vld [vmem:[%s3] sm:$0xf]
    %v102 = vld [vmem:[%s3 + $0x4] sm:$0xf]
    %v103 = vld [vmem:[%s3 + $0x8] sm:$0xf]
    %v104 = vld [vmem:[%s3 + $0xc] sm:$0xf]
    %v105 = vld [vmem:[%s3 + $0x10] sm:$0xf]
    %v106 = vld [vmem:[%s3 + $0x14] sm:$0xf]
    %v107 = vld [vmem:[%s3 + $0x18] sm:$0xf]
    %v108 = vld [vmem:[%s3 + $0x1c] sm:$0xf]
    %v109 = vld [vmem:[%s4] sm:$0x1]
    %v111 = vlaneseq
    %v112 = vshrl.u32 %v111, 7
    %v113 = vsub.s32 0, %v112
    %v114 = vrot.slane %v109, %v113
    %v124 = vunpack.c.l.b16 %v101
    %v125 = vunpack.c.l.b16 %v102
    %v126 = vunpack.c.l.b16 %v103
    %v127 = vunpack.c.l.b16 %v104
    %v128 = vunpack.c.l.b16 %v105
    %v129 = vunpack.c.l.b16 %v106
    %v130 = vunpack.c.l.b16 %v107
    %v131 = vunpack.c.l.b16 %v108
    %v132 = vpack.c.b16 %v125, %v124
    %v133 = vpack.c.b16 %v127, %v126
    %v134 = vpack.c.b16 %v129, %v128
    %v135 = vpack.c.b16 %v131, %v130
    %vm140 = vcmask 523264
    %v142 = vsel %vm140, %v100, 0
    %144 = vmatprep.subr.bf16.mxu0 0
    %145 = vmatpush1.bf16.msra.mxu0 %v132
    %146 = vmatprep.subr.bf16.mxu0 0
    %147 = vmatpush1.bf16.msra.mxu0 %v133
    %148 = vmatprep.subr.bf16.mxu0 0
    %149 = vmatpush1.bf16.msra.mxu0 %v134
    %150 = vmatprep.subr.bf16.mxu0 0
    %151 = vmatpush1.bf16.msra.mxu0 %v135
    %152 = vmatprep.subr.bf16.mxu0 0
    %153 = vmatpush1.bf16.msra.mxu0 0
    %154 = vmatprep.subr.bf16.mxu0 0
    %155 = vmatpush1.bf16.msra.mxu0 0
    %156 = vmatprep.subr.bf16.mxu0 0
    %157 = vmatpush1.bf16.msra.mxu0 0
    %158 = vmatprep.subr.bf16.mxu0 0
    %159 = vmatpush1.bf16.msra.mxu0 0
    %160 = vmatprep.subr.bf16.mxu0 0
    %161 = vmatpush1.bf16.msra.mxu0 0
    %162 = vmatprep.subr.bf16.mxu0 0
    %163 = vmatpush1.bf16.msra.mxu0 0
    %164 = vmatprep.subr.bf16.mxu0 0
    %165 = vmatpush1.bf16.msra.mxu0 0
    %166 = vmatprep.subr.bf16.mxu0 0
    %167 = vmatpush1.bf16.msra.mxu0 0
    %168 = vmatprep.subr.bf16.mxu0 0
    %169 = vmatpush1.bf16.msra.mxu0 0
    %170 = vmatprep.subr.bf16.mxu0 0
    %171 = vmatpush1.bf16.msra.mxu0 0
    %172 = vmatprep.subr.bf16.mxu0 0
    %173 = vmatpush1.bf16.msra.mxu0 0
    %174 = vmatprep.subr.bf16.mxu0 0
    %175 = vmatpush1.bf16.msra.mxu0 0
    %176 = vmatprep.mubr.bf16.mxu0 0
    %177 = vmatmul.mubr.bf16.gmra.mrb[0].mxu0 %v142
    %v178 = vpop.f32.mrb[0].mxu0
    %v179 = vadd.f32 %v114, %v178
    %v180 = vpop.f32.mrb[0].mxu0
    %v181 = vpop.f32.mrb[0].mxu0
    %v182 = vpop.f32.mrb[0].mxu0
    %183 = vdwg.mxu0
    %184 = vst [vmem:[#allocation2] sm:$0xff] %v179
    %v185 = vld [vmem:[%s5] sm:$0xf]
    %v186 = vld [vmem:[%s5 + $0x4] sm:$0xf]
    %v187 = vld [vmem:[%s5 + $0x8] sm:$0xf]
    %v188 = vld [vmem:[%s5 + $0xc] sm:$0xf]
    %v189 = vld [vmem:[%s5 + $0x10] sm:$0xf]
    %v190 = vld [vmem:[%s5 + $0x14] sm:$0xf]
    %v191 = vld [vmem:[%s5 + $0x18] sm:$0xf]
    %v192 = vld [vmem:[%s5 + $0x1c] sm:$0xf]
    %v193 = vld [vmem:[%s6] sm:$0x1]
    %v195 = vlaneseq
    %v196 = vshrl.u32 %v195, 7
    %v197 = vsub.s32 0, %v196
    %v198 = vrot.slane %v193, %v197
    %v208 = vunpack.c.l.b16 %v185
    %v209 = vunpack.c.l.b16 %v186
    %v210 = vunpack.c.l.b16 %v187
    %v211 = vunpack.c.l.b16 %v188
    %v212 = vunpack.c.l.b16 %v189
    %v213 = vunpack.c.l.b16 %v190
    %v214 = vunpack.c.l.b16 %v191
    %v215 = vunpack.c.l.b16 %v192
    %v216 = vpack.c.b16 %v209, %v208
    %v217 = vpack.c.b16 %v211, %v210
    %v218 = vpack.c.b16 %v213, %v212
    %v219 = vpack.c.b16 %v215, %v214
    %224 = vmatprep.subr.bf16.mxu0 0
    %225 = vmatpush1.bf16.msra.mxu0 %v216
    %226 = vmatprep.subr.bf16.mxu0 0
    %227 = vmatpush1.bf16.msra.mxu0 %v217
    %228 = vmatprep.subr.bf16.mxu0 0
    %229 = vmatpush1.bf16.msra.mxu0 %v218
    %230 = vmatprep.subr.bf16.mxu0 0
    %231 = vmatpush1.bf16.msra.mxu0 %v219
    %232 = vmatprep.subr.bf16.mxu0 0
    %233 = vmatpush1.bf16.msra.mxu0 0
    %234 = vmatprep.subr.bf16.mxu0 0
    %235 = vmatpush1.bf16.msra.mxu0 0
    %236 = vmatprep.subr.bf16.mxu0 0
    %237 = vmatpush1.bf16.msra.mxu0 0
    %238 = vmatprep.subr.bf16.mxu0 0
    %239 = vmatpush1.bf16.msra.mxu0 0
    %240 = vmatprep.subr.bf16.mxu0 0
    %241 = vmatpush1.bf16.msra.mxu0 0
    %242 = vmatprep.subr.bf16.mxu0 0
    %243 = vmatpush1.bf16.msra.mxu0 0
    %244 = vmatprep.subr.bf16.mxu0 0
    %245 = vmatpush1.bf16.msra.mxu0 0
    %246 = vmatprep.subr.bf16.mxu0 0
    %247 = vmatpush1.bf16.msra.mxu0 0
    %248 = vmatprep.subr.bf16.mxu0 0
    %249 = vmatpush1.bf16.msra.mxu0 0
    %250 = vmatprep.subr.bf16.mxu0 0
    %251 = vmatpush1.bf16.msra.mxu0 0
    %252 = vmatprep.subr.bf16.mxu0 0
    %253 = vmatpush1.bf16.msra.mxu0 0
    %254 = vmatprep.subr.bf16.mxu0 0
    %255 = vmatpush1.bf16.msra.mxu0 0
    %256 = vmatprep.mubr.bf16.mxu0 0
    %257 = vmatmul.mubr.bf16.gmra.mrb[0].mxu0 %v142
    %v258 = vpop.f32.mrb[0].mxu0
    %v259 = vadd.f32 %v198, %v258
    %v260 = vpop.f32.mrb[0].mxu0
    %v261 = vpop.f32.mrb[0].mxu0
    %v262 = vpop.f32.mrb[0].mxu0
    %263 = vdwg.mxu0
    %264 = vmax.xlane.f32.xlu0 %v259
    %v265 = vpop.xlane.xlu0 %264
    %v266 = vsub.f32 %v259, %v265
    %v267 = vmul.f32 %v266, 1.442695
    %v268 = vpow.pop %v267
    %269 = vadd.xlane.f32.xlu0 %v268
    %v270 = vpop.xlane.xlu0 %269
    %v271 = vlog2.pop %v270
    %v272 = vmul.f32 %v271, 0.6931472
    %v273 = vsub.f32 %v266, %v272
    %274 = vst [vmem:[#allocation4] sm:$0xff] %v273
    // Predicated region
    $region30: #{finetune_forward.1} parent=1 // pred_check
      _
    $region31: #{finetune_forward.1} parent=1 // pred_check_branch
      %276 = sbr.rel (0) target = $region33
    $region32: #{finetune_forward.1} parent=1 // pred_region
      %s278 = ssub.s32 128, 128
      %279 = vsyncadd [#allocation3], %s278
      %s281 = sshll.u32 [#allocation2], 4
      %s282 = int_to_ptr.vmem [resolvable:$true] %s281
      %284 = dma.vmem_to_hbm [thread:$0]  %s282, 128, %s7, [#allocation3]
    $region33: #{finetune_forward.1} parent=1 // pred_fallthru
      _
    // Predicated region
    $region34: #{finetune_forward.1} parent=1 // pred_check
      _
    $region35: #{finetune_forward.1} parent=1 // pred_check_branch
      %286 = sbr.rel (0) target = $region37
    $region36: #{finetune_forward.1} parent=1 // pred_region
      %s288 = ssub.s32 128, 128
      %289 = vsyncadd [#allocation5], %s288
      %s291 = sshll.u32 [#allocation4], 4
      %s292 = int_to_ptr.vmem [resolvable:$true] %s291
      %294 = dma.vmem_to_hbm [thread:$0]  %s292, 128, %s8, [#allocation5]
    $region37: #{finetune_forward.1} parent=1 // pred_fallthru
      _
    // Predicated region
    $region38: #{finetune_forward.1} parent=1 // pred_check
      _
    $region39: #{finetune_forward.1} parent=1 // pred_check_branch
      %296 = sbr.rel (0) target = $region41
    $region40: #{finetune_forward.1} parent=1 // pred_region
      %297 = dma.done [#allocation3], 128
    $region41: #{finetune_forward.1} parent=1 // pred_fallthru
      _
    // Predicated region
    $region42: #{finetune_forward.1} parent=1 // pred_check
      _
    $region43: #{finetune_forward.1} parent=1 // pred_check_branch
      %299 = sbr.rel (0) target = $region45
    $region44: #{finetune_forward.1} parent=1 // pred_region
      %300 = dma.done [#allocation5], 128
    $region45: #{finetune_forward.1} parent=1 // pred_fallthru
      _
    %301 = vsyncpa [#allocation3], 1
    %302 = vsyncpa [#allocation5], 1

</llo_original>
